<compile_context>
chip_gen: v7x
topology: tpu7x:2x2x1
jax: 0.10.0
libtpu: 0.0.40
codegen_flags: <defaults>
</compile_context>

<pallas_src>
import jax
import jax.numpy as jnp
from jax.experimental import pallas as pl
from jax.experimental.pallas import tpu as pltpu

DOWNSAMPLE_FACTOR = 320  # HubertWithKmeans.downsample_factor


def round_down_nearest_multiple(num, divisor):
    return num // divisor * divisor


def curtail_to_multiple(t, mult, from_left=False):
    data_len = t.shape[-1]
    rounded = round_down_nearest_multiple(data_len, mult)
    if from_left:
        return t[..., -rounded:]
    return t[..., :rounded]


def _round_up(x, m):
    return ((x + m - 1) // m) * m


def _hubert_kmeans_kernel(frames_ref, w_ref, centers_neg2t_ref, c_sq_ref, out_ref):
    """One grid step == one tile of tR (batch*time) frames.

    frames_ref        : (tR, F)  raw audio frames for this row tile
    w_ref             : (F, D)   synthetic feature projection (grid-invariant)
    centers_neg2t_ref : (D, C)   -2 * cluster_centers^T       (grid-invariant)
    c_sq_ref          : (1, C)   precomputed ||c||^2          (grid-invariant)
    out_ref           : (1, tR)  int32 cluster ids (lane-dense)
    """
    x = frames_ref[...]                                                    # (tR, F)

    # "HuBERT" embedding stand-in: MXU matmul, f32 accumulation.
    embed = jnp.dot(x, w_ref[...], preferred_element_type=jnp.float32)    # (tR, D)

    # argmin_c ||e - c||^2 == argmin_c (||c||^2 - 2 e.c); the per-row ||e||^2
    # term is dropped and the -2 scale is pre-folded into the centers operand.
    scores = c_sq_ref[...] + jnp.dot(embed, centers_neg2t_ref[...],
                                     preferred_element_type=jnp.float32)  # (tR, C)

    # First-index-on-ties argmin (matches torch argmax of -cdist).
    # NOTE: jnp.argmin lowers through a variadic reduce Mosaic rejects; keep
    # the explicit two-reduce formulation (negligible cost at small C).
    num_clusters = scores.shape[-1]
    col_idx = jax.lax.broadcasted_iota(jnp.int32, scores.shape, 1)         # (tR, C)
    min_s = jnp.min(scores, axis=-1, keepdims=True)                        # (tR, 1)
    masked_idx = jnp.where(scores <= min_s, col_idx, jnp.int32(num_clusters))
    out_ref[0, :] = jnp.min(masked_idx, axis=-1).astype(jnp.int32)         # (tR,)


def _choose_tile_rows(n_rows, requested=None):
    """Row-tile size: multiple of 128 (lane-dense output block)."""
    if requested is not None:
        return max(128, _round_up(min(requested, max(n_rows, 1)), 128))
    # Heuristic per perf review:
    #  * aim for >= ~4 grid steps so both v7x TensorCores get work,
    #  * but >= 1024 rows/tile to amortize ~0.35 us per-grid-step overhead,
    #  * capped at 2048 rows: double-buffered frames block ~6 MiB (fits the
    #    32 MiB scoped VMEM on every generation, incl. v7x's 64 MiB physical).
    tr = max(1024, _round_up(pl.cdiv(n_rows, 4), 128))
    tr = min(tr, 2048)
    tr = min(tr, _round_up(n_rows, 128))
    return max(tr, 128)


def hubert_with_kmeans_forward(wav, proj_w, cluster_centers,
                               seq_len_multiple_of=DOWNSAMPLE_FACTOR,
                               flatten=True, tile_rows=None):
    """Forward pass of HubertWithKmeans (synthetic feature extractor).

    wav             : [B, L]  float32 (or bfloat16 -- no wrapper-side cast)
    proj_w          : [F=320, D]
    cluster_centers : [C, D]
    returns         : [B, T]  int32 cluster ids
    """
    # TODO(synk): resample(wav, input_sample_hz, target_sample_hz) not
    # implemented (forward is exercised with input_sample_hz=None).
    if seq_len_multiple_of is not None:
        wav = curtail_to_multiple(wav, seq_len_multiple_of)

    B, L = wav.shape
    F = DOWNSAMPLE_FACTOR
    T = L // F
    D = proj_w.shape[1]
    C = cluster_centers.shape[0]

    # TODO(synk): real fairseq HuBERT (conv feature extractor + transformer up
    # to output_layer=9) is checkpoint-dependent; replaced by frame reshape +
    # linear projection as a deterministic stand-in.
    frames = wav[:, : T * F].reshape(B * T, F)    # contiguous -> free reshape
    R = B * T

    # Grid-invariant centers work hoisted out of the kernel; -2 folded in so
    # the kernel's score is a single add of ||c||^2 and one MXU product.
    centers_neg2t = -2.0 * cluster_centers.T                              # (D, C)
    c_sq = jnp.sum(jnp.square(cluster_centers.astype(jnp.float32)),
                   axis=-1)[None, :]                                      # (1, C)

    tR = _choose_tile_rows(R, tile_rows)
    n_tiles = pl.cdiv(R, tR)
    R_out = n_tiles * tR   # lane-dense output allocation (free, no data copy)

    # Pad only when the whole input is smaller than one tile (tiny copy).  For
    # R >= tR the partial boundary block of the frames input is masked by
    # Pallas; garbage rows only yield cluster ids that are sliced off below.
    if R < tR:
        frames = jnp.pad(frames, ((0, tR - R), (0, 0)))

    out = pl.pallas_call(
        _hubert_kmeans_kernel,
        out_shape=jax.ShapeDtypeStruct((1, R_out), jnp.int32),
        grid_spec=pltpu.PrefetchScalarGridSpec(
            num_scalar_prefetch=0,
            grid=(n_tiles,),
            in_specs=[
                pl.BlockSpec((tR, F), lambda r: (r, 0)),
                pl.BlockSpec((F, D), lambda r: (0, 0)),
                pl.BlockSpec((D, C), lambda r: (0, 0)),
                pl.BlockSpec((1, C), lambda r: (0, 0)),
            ],
            out_specs=pl.BlockSpec((1, tR), lambda r: (0, r)),
        ),
        compiler_params=pltpu.CompilerParams(
            dimension_semantics=("parallel",),
            # v5e scoped default is only 16 MiB; 32 MiB keeps the deeper
            # pipeline legal on every generation (on v7x stay < ~48 MiB).
            vmem_limit_bytes=32 * 1024 * 1024,
        ),
    )(frames, proj_w, centers_neg2t, c_sq)

    clusters = out[0, :R].reshape(B, T)   # [B, T]

    # Mirror torch semantics: `flatten=True` returns clusters as-is; otherwise
    # rearrange('b ... -> b (...)').  For a [B, T] result both are identical.
    if flatten:
        return clusters
    return clusters.reshape(B, -1)


def _reference_forward(wav, proj_w, cluster_centers,
                       seq_len_multiple_of=DOWNSAMPLE_FACTOR):
    wav = curtail_to_multiple(wav, seq_len_multiple_of)
    B, L = wav.shape
    F = DOWNSAMPLE_FACTOR
    T = L // F
    frames = wav[:, : T * F].reshape(B, T, F)
    embed = jnp.einsum("btf,fd->btd", frames, proj_w)
    # -cdist, argmax
    diff = embed[:, :, None, :] - cluster_centers[None, None, :, :]
    dists = -jnp.sqrt(jnp.sum(diff * diff, axis=-1))
    return jnp.argmax(dists, axis=-1).astype(jnp.int32)


if __name__ == "__main__":
    key = jax.random.PRNGKey(0)
    k_wav, k_w, k_c, k_wav2, k_wav3 = jax.random.split(key, 5)

    B = 2
    T = 8
    L = T * DOWNSAMPLE_FACTOR + 37   # non-multiple -> exercises curtail_to_multiple
    D = 32                           # embed dim (synthetic)
    C = 16                           # codebook_size (kmeans.n_clusters, synthetic)

    wav = jax.random.normal(k_wav, (B, L), dtype=jnp.float32)
    proj_w = jax.random.normal(k_w, (DOWNSAMPLE_FACTOR, D), dtype=jnp.float32) * 0.05
    cluster_centers = jax.random.normal(k_c, (C, D), dtype=jnp.float32)

    # Check 1: small input, single tile (tiny pad path).
    clusters = hubert_with_kmeans_forward(wav, proj_w, cluster_centers)
    clusters = jax.block_until_ready(clusters)
    ref = _reference_forward(wav, proj_w, cluster_centers)
    assert clusters.shape == (B, T), clusters.shape
    assert clusters.dtype == jnp.int32
    assert bool(jnp.all(clusters == ref)), (clusters, ref)

    # Check 2: multi-tile grid with an UN-padded ragged boundary block
    # (272 rows, tR=128 -> 3 tiles, last block partial).
    T2 = 136
    L2 = T2 * DOWNSAMPLE_FACTOR + 5
    wav2 = jax.random.normal(k_wav2, (B, L2), dtype=jnp.float32)
    clusters2 = hubert_with_kmeans_forward(wav2, proj_w, cluster_centers,
                                           tile_rows=128)
    clusters2 = jax.block_until_ready(clusters2)
    ref2 = _reference_forward(wav2, proj_w, cluster_centers)
    assert clusters2.shape == (B, T2), clusters2.shape
    assert bool(jnp.all(clusters2 == ref2)), (clusters2, ref2)

    # Check 3: default adaptive tiling on a longer input (big tile, no pad,
    # ragged boundary).  Near-tie cluster assignments can legitimately differ
    # from the sqrt-cdist reference by fp rounding (expanded-form scores), so
    # require near-total agreement rather than exact equality here.
    T3 = 1200
    L3 = T3 * DOWNSAMPLE_FACTOR
    wav3 = jax.random.normal(k_wav3, (B, L3), dtype=jnp.float32)
    clusters3 = hubert_with_kmeans_forward(wav3, proj_w, cluster_centers)
    clusters3 = jax.block_until_ready(clusters3)
    ref3 = _reference_forward(wav3, proj_w, cluster_centers)
    assert clusters3.shape == (B, T3), clusters3.shape
    agreement = jnp.mean((clusters3 == ref3).astype(jnp.float32))
    assert bool(agreement > 0.99), float(agreement)

    print("KERNEL_OK")
</pallas_src>

<mosaic_0001>
module attributes {stable_mosaic.version = 11 : i64} {
  func.func @_hubert_kmeans_kernel(%arg0: i32, %arg1: memref<128x320xf32, #tpu.memory_space<vmem>>, %arg2: memref<320x32xf32, #tpu.memory_space<vmem>>, %arg3: memref<32x16xf32, #tpu.memory_space<vmem>>, %arg4: memref<1x16xf32, #tpu.memory_space<vmem>>, %arg5: memref<1x128xi32, #tpu.memory_space<vmem>>) attributes {dimension_semantics = [#tpu.dimension_semantics<parallel>], iteration_bounds = array<i64: 1>, scalar_prefetch = 0 : i64, scratch_operands = 0 : i64, tpu.core_type = #tpu.core_type<tc>, window_params = [{transform_indices = @transform_0, window_bounds = array<i64: 128, 320>}, {pipeline_mode = #tpu.pipeline_mode<synchronous>, transform_indices = @transform_1, window_bounds = array<i64: 320, 32>}, {pipeline_mode = #tpu.pipeline_mode<synchronous>, transform_indices = @transform_2, window_bounds = array<i64: 32, 16>}, {pipeline_mode = #tpu.pipeline_mode<synchronous>, transform_indices = @transform_3, window_bounds = array<i64: 1, 16>}, {transform_indices = @transform_4, window_bounds = array<i64: 1, 128>}]} {
    %c0 = arith.constant 0 : index
    %c0_0 = arith.constant 0 : index
    %0 = vector.load %arg1[%c0, %c0_0] : memref<128x320xf32, #tpu.memory_space<vmem>>, vector<128x320xf32>
    %c0_1 = arith.constant 0 : index
    %c0_2 = arith.constant 0 : index
    %1 = vector.load %arg2[%c0_1, %c0_2] : memref<320x32xf32, #tpu.memory_space<vmem>>, vector<320x32xf32>
    %cst = arith.constant dense<0.000000e+00> : vector<128x32xf32>
    %2 = tpu.matmul %0, %1, %cst {dimension_numbers = #tpu.dot_dimension_numbers<[1], [0], [0], [1], [0, 0, 1, 1], [], []>} : vector<128x320xf32>, vector<320x32xf32>, vector<128x32xf32> -> vector<128x32xf32>
    %c0_3 = arith.constant 0 : index
    %c0_4 = arith.constant 0 : index
    %3 = vector.load %arg4[%c0_3, %c0_4] : memref<1x16xf32, #tpu.memory_space<vmem>>, vector<1x16xf32>
    %c0_5 = arith.constant 0 : index
    %c0_6 = arith.constant 0 : index
    %4 = vector.load %arg3[%c0_5, %c0_6] : memref<32x16xf32, #tpu.memory_space<vmem>>, vector<32x16xf32>
    %cst_7 = arith.constant dense<0.000000e+00> : vector<128x16xf32>
    %5 = tpu.matmul %2, %4, %cst_7 {dimension_numbers = #tpu.dot_dimension_numbers<[1], [0], [0], [1], [0, 0, 1, 1], [], []>} : vector<128x32xf32>, vector<32x16xf32>, vector<128x16xf32> -> vector<128x16xf32>
    %6 = vector.broadcast %3 : vector<1x16xf32> to vector<128x16xf32>
    %7 = arith.addf %6, %5 : vector<128x16xf32>
    %8 = tpu.iota {dimensions = array<i32: 1>} : vector<128x16xi32>
    %cst_8 = arith.constant dense<0x7F800000> : vector<128xf32>
    %9 = vector.multi_reduction <minimumf>, %7, %cst_8 [1] : vector<128x16xf32> to vector<128xf32>
    %10 = vector.shape_cast %9 : vector<128xf32> to vector<128x1xf32>
    %11 = vector.broadcast %10 : vector<128x1xf32> to vector<128x16xf32>
    %12 = arith.cmpf ole, %7, %11 : vector<128x16xf32>
    %c16_i32 = arith.constant 16 : i32
    %13 = vector.broadcast %c16_i32 : i32 to vector<128x16xi32>
    %14 = arith.select %12, %8, %13 : vector<128x16xi1>, vector<128x16xi32>
    %cst_9 = arith.constant dense<2147483647> : vector<128xi32>
    %15 = vector.multi_reduction <minsi>, %14, %cst_9 [1] : vector<128x16xi32> to vector<128xi32>
    %c0_10 = arith.constant 0 : index
    %c0_11 = arith.constant 0 : index
    %16 = vector.load %arg5[%c0_10, %c0_11] : memref<1x128xi32, #tpu.memory_space<vmem>>, vector<1x128xi32>
    %17 = vector.shape_cast %16 : vector<1x128xi32> to vector<128xi32>
    %18 = vector.shape_cast %15 : vector<128xi32> to vector<1x128xi32>
    tpu.vector_store %arg5[%c0_10, %c0_11], %18 {strides = array<i32>} : memref<1x128xi32, #tpu.memory_space<vmem>>, vector<1x128xi32>,
    return
  }
  func.func @transform_0(%arg0: i32) -> (i32, i32) {
    %c0_i32 = arith.constant 0 : i32
    %c0_i32_0 = arith.constant 0 : i32
    return %arg0, %c0_i32 : i32, i32
  }
  func.func @transform_1(%arg0: i32) -> (i32, i32) {
    %c0_i32 = arith.constant 0 : i32
    %c0_i32_0 = arith.constant 0 : i32
    %c0_i32_1 = arith.constant 0 : i32
    return %c0_i32, %c0_i32_0 : i32, i32
  }
  func.func @transform_2(%arg0: i32) -> (i32, i32) {
    %c0_i32 = arith.constant 0 : i32
    %c0_i32_0 = arith.constant 0 : i32
    %c0_i32_1 = arith.constant 0 : i32
    return %c0_i32, %c0_i32_0 : i32, i32
  }
  func.func @transform_3(%arg0: i32) -> (i32, i32) {
    %c0_i32 = arith.constant 0 : i32
    %c0_i32_0 = arith.constant 0 : i32
    %c0_i32_1 = arith.constant 0 : i32
    return %c0_i32, %c0_i32_0 : i32, i32
  }
  func.func @transform_4(%arg0: i32) -> (i32, i32) {
    %c0_i32 = arith.constant 0 : i32
    %c0_i32_0 = arith.constant 0 : i32
    return %c0_i32, %arg0 : i32, i32
  }
}

</mosaic_0001>

<llo_original>
// kernel: tpu_custom_call.1
$region0: #{tpu_custom_call.1}
  #allocation0 [shape = 'u32[]', space=smem, size = 0x4, offset = 0x4, fixed_abs, tag = 'smem constant byte address 0x4 - core index']
  #allocation1 [shape = 'u32[144,128]{1,0:T(1,128)}', space=vmem, size = 0x12000, scoped, tag = 'internal scratch']
  %s0 = inlined_call_operand.vmem [shape: f32[128,320], index: 0, kind: input, shape index: {}]
  %s1 = inlined_call_operand.vmem [shape: f32[320,32], index: 1, kind: input, shape index: {}]
  %s2 = inlined_call_operand.vmem [shape: f32[32,16], index: 2, kind: input, shape index: {}]
  %s3 = inlined_call_operand.vmem [shape: f32[1,16], index: 3, kind: input, shape index: {}]
  %s4 = inlined_call_operand.hbm [shape: s32[1,128], index: 4, kind: output, shape index: {}]
  %s5 = sld [smem:[#allocation0]]
  $region26: #{tpu_custom_call.1} parent=0
    _
  %s7 = ssub.s32 1, %s5
  %s8 = scalar_select 0, %s7, %s5
  $region1: #{tpu_custom_call.1} parent=0
    #allocation2 [shape = 'u8[512]{0}', space=vmem, size = 0x400, scoped, tag = 'output window, operand 0, single buffered']
    #allocation3 [shape = 's32[1]{0}', space=sflag, size = 0x4, scoped, tag = 'scoped memory for tpu_custom_call.1']
    %9 = vsyncpa [#allocation3], 0
    // Predicated region
    $region2: #{tpu_custom_call.1} parent=1 // pred_check
      _
    $region3: #{tpu_custom_call.1} parent=1 // pred_check_branch
      %11 = sbr.rel (0) target = $region5
    $region4: #{tpu_custom_call.1} parent=1 // pred_region
      _
    $region5: #{tpu_custom_call.1} parent=1 // pred_fallthru
      _
    // Predicated region
    $region6: #{tpu_custom_call.1} parent=1 // pred_check
      _
    $region7: #{tpu_custom_call.1} parent=1 // pred_check_branch
      %13 = sbr.rel (0) target = $region9
    $region8: #{tpu_custom_call.1} parent=1 // pred_region
      _
    $region9: #{tpu_custom_call.1} parent=1 // pred_fallthru
      _
    // Predicated region
    $region10: #{tpu_custom_call.1} parent=1 // pred_check
      _
    $region11: #{tpu_custom_call.1} parent=1 // pred_check_branch
      %15 = sbr.rel (0) target = $region13
    $region12: #{tpu_custom_call.1} parent=1 // pred_region
      _
    $region13: #{tpu_custom_call.1} parent=1 // pred_fallthru
      _
    // Predicated region
    $region14: #{tpu_custom_call.1} parent=1 // pred_check
      _
    $region15: #{tpu_custom_call.1} parent=1 // pred_check_branch
      %17 = sbr.rel (0) target = $region17
    $region16: #{tpu_custom_call.1} parent=1 // pred_region
      _
    $region17: #{tpu_custom_call.1} parent=1 // pred_fallthru
      _
    %v18 = vld [vmem:[%s0] sm:$0xff]
    %v19 = vld [vmem:[%s0 + $0x8] sm:$0xff]
    %v20 = vld [vmem:[%s0 + $0x10] sm:$0xff]
    %v21 = vld [vmem:[%s0 + $0x18] sm:$0xff]
    %v22 = vld [vmem:[%s0 + $0x20] sm:$0xff]
    %v23 = vld [vmem:[%s0 + $0x28] sm:$0xff]
    %v24 = vld [vmem:[%s0 + $0x30] sm:$0xff]
    %v25 = vld [vmem:[%s0 + $0x38] sm:$0xff]
    %v26 = vld [vmem:[%s0 + $0x40] sm:$0xff]
    %v27 = vld [vmem:[%s0 + $0x48] sm:$0xff]
    %v28 = vld [vmem:[%s0 + $0x50] sm:$0xff]
    %v29 = vld [vmem:[%s0 + $0x58] sm:$0xff]
    %v30 = vld [vmem:[%s0 + $0x60] sm:$0xff]
    %v31 = vld [vmem:[%s0 + $0x68] sm:$0xff]
    %v32 = vld [vmem:[%s0 + $0x70] sm:$0xff]
    %v33 = vld [vmem:[%s0 + $0x78] sm:$0xff]
    %v34 = vld [vmem:[%s0 + $0x80] sm:$0xff]
    %v35 = vld [vmem:[%s0 + $0x88] sm:$0xff]
    %v36 = vld [vmem:[%s0 + $0x90] sm:$0xff]
    %v37 = vld [vmem:[%s0 + $0x98] sm:$0xff]
    %v38 = vld [vmem:[%s0 + $0xa0] sm:$0xff]
    %v39 = vld [vmem:[%s0 + $0xa8] sm:$0xff]
    %v40 = vld [vmem:[%s0 + $0xb0] sm:$0xff]
    %v41 = vld [vmem:[%s0 + $0xb8] sm:$0xff]
    %v42 = vld [vmem:[%s0 + $0xc0] sm:$0xff]
    %v43 = vld [vmem:[%s0 + $0xc8] sm:$0xff]
    %v44 = vld [vmem:[%s0 + $0xd0] sm:$0xff]
    %v45 = vld [vmem:[%s0 + $0xd8] sm:$0xff]
    %v46 = vld [vmem:[%s0 + $0xe0] sm:$0xff]
    %v47 = vld [vmem:[%s0 + $0xe8] sm:$0xff]
    %v48 = vld [vmem:[%s0 + $0xf0] sm:$0xff]
    %v49 = vld [vmem:[%s0 + $0xf8] sm:$0xff]
    %v50 = vld [vmem:[%s0 + $0x100] sm:$0xff]
    %v51 = vld [vmem:[%s0 + $0x108] sm:$0xff]
    %v52 = vld [vmem:[%s0 + $0x110] sm:$0xff]
    %v53 = vld [vmem:[%s0 + $0x118] sm:$0xff]
    %v54 = vld [vmem:[%s0 + $0x120] sm:$0xff]
    %v55 = vld [vmem:[%s0 + $0x128] sm:$0xff]
    %v56 = vld [vmem:[%s0 + $0x130] sm:$0xff]
    %v57 = vld [vmem:[%s0 + $0x138] sm:$0xff]
    %v58 = vld [vmem:[%s0 + $0x140] sm:$0xff]
    %v59 = vld [vmem:[%s0 + $0x148] sm:$0xff]
    %v60 = vld [vmem:[%s0 + $0x150] sm:$0xff]
    %v61 = vld [vmem:[%s0 + $0x158] sm:$0xff]
    %v62 = vld [vmem:[%s0 + $0x160] sm:$0xff]
    %v63 = vld [vmem:[%s0 + $0x168] sm:$0xff]
    %v64 = vld [vmem:[%s0 + $0x170] sm:$0xff]
    %v65 = vld [vmem:[%s0 + $0x178] sm:$0xff]
    %v66 = vld [vmem:[%s1] sm:$0xff]
    %v67 = vld [vmem:[%s1 + $0x8] sm:$0xff]
    %v68 = vld [vmem:[%s1 + $0x10] sm:$0xff]
    %v69 = vld [vmem:[%s1 + $0x18] sm:$0xff]
    %v70 = vld [vmem:[%s1 + $0x20] sm:$0xff]
    %v71 = vld [vmem:[%s1 + $0x28] sm:$0xff]
    %v72 = vld [vmem:[%s1 + $0x30] sm:$0xff]
    %v73 = vld [vmem:[%s1 + $0x38] sm:$0xff]
    %v74 = vld [vmem:[%s1 + $0x40] sm:$0xff]
    %v75 = vld [vmem:[%s1 + $0x48] sm:$0xff]
    %v76 = vld [vmem:[%s1 + $0x50] sm:$0xff]
    %v77 = vld [vmem:[%s1 + $0x58] sm:$0xff]
    %v78 = vld [vmem:[%s1 + $0x60] sm:$0xff]
    %v79 = vld [vmem:[%s1 + $0x68] sm:$0xff]
    %v80 = vld [vmem:[%s1 + $0x70] sm:$0xff]
    %v81 = vld [vmem:[%s1 + $0x78] sm:$0xff]
    %v82 = vld [vmem:[%s1 + $0x80] sm:$0xff]
    %v83 = vld [vmem:[%s1 + $0x88] sm:$0xff]
    %v84 = vld [vmem:[%s1 + $0x90] sm:$0xff]
    %v85 = vld [vmem:[%s1 + $0x98] sm:$0xff]
    %v86 = vld [vmem:[%s1 + $0xa0] sm:$0xff]
    %v87 = vld [vmem:[%s1 + $0xa8] sm:$0xff]
    %v88 = vld [vmem:[%s1 + $0xb0] sm:$0xff]
    %v89 = vld [vmem:[%s1 + $0xb8] sm:$0xff]
    %v90 = vld [vmem:[%s1 + $0xc0] sm:$0xff]
    %v91 = vld [vmem:[%s1 + $0xc8] sm:$0xff]
    %v92 = vld [vmem:[%s1 + $0xd0] sm:$0xff]
    %v93 = vld [vmem:[%s1 + $0xd8] sm:$0xff]
    %v94 = vld [vmem:[%s1 + $0xe0] sm:$0xff]
    %v95 = vld [vmem:[%s1 + $0xe8] sm:$0xff]
    %v96 = vld [vmem:[%s1 + $0xf0] sm:$0xff]
    %v97 = vld [vmem:[%s1 + $0xf8] sm:$0xff]
    %v98 = vld [vmem:[%s1 + $0x100] sm:$0xff]
    %v99 = vld [vmem:[%s1 + $0x108] sm:$0xff]
    %v100 = vld [vmem:[%s1 + $0x110] sm:$0xff]
    %v101 = vld [vmem:[%s1 + $0x118] sm:$0xff]
    %v102 = vld [vmem:[%s1 + $0x120] sm:$0xff]
    %v103 = vld [vmem:[%s1 + $0x128] sm:$0xff]
    %v104 = vld [vmem:[%s1 + $0x130] sm:$0xff]
    %v105 = vld [vmem:[%s1 + $0x138] sm:$0xff]
    %vm106 = vcmask 523264
    %v108 = vsel %vm106, %v20, 0
    %v111 = vsel %vm106, %v23, 0
    %v114 = vsel %vm106, %v26, 0
    %v117 = vsel %vm106, %v29, 0
    %v120 = vsel %vm106, %v32, 0
    %v123 = vsel %vm106, %v35, 0
    %v126 = vsel %vm106, %v38, 0
    %v129 = vsel %vm106, %v41, 0
    %v132 = vsel %vm106, %v44, 0
    %v135 = vsel %vm106, %v47, 0
    %v138 = vsel %vm106, %v50, 0
    %v141 = vsel %vm106, %v53, 0
    %v144 = vsel %vm106, %v56, 0
    %v147 = vsel %vm106, %v59, 0
    %v150 = vsel %vm106, %v62, 0
    %v153 = vsel %vm106, %v65, 0
    %155 = vmatprep.subr.mxu0 0.0
    %156 = vmatpush1.msra.mxu0 %v66
    %157 = vmatprep.subr.mxu0 0.0
    %158 = vmatpush1.msra.mxu0 %v67
    %159 = vmatprep.subr.mxu0 0.0
    %160 = vmatpush1.msra.mxu0 %v68
    %161 = vmatprep.subr.mxu0 0.0
    %162 = vmatpush1.msra.mxu0 %v69
    %163 = vmatprep.subr.mxu0 0.0
    %164 = vmatpush1.msra.mxu0 %v70
    %165 = vmatprep.subr.mxu0 0.0
    %166 = vmatpush1.msra.mxu0 %v71
    %167 = vmatprep.subr.mxu0 0.0
    %168 = vmatpush1.msra.mxu0 %v72
    %169 = vmatprep.subr.mxu0 0.0
    %170 = vmatpush1.msra.mxu0 %v73
    %171 = vmatprep.subr.mxu0 0.0
    %172 = vmatpush1.msra.mxu0 %v74
    %173 = vmatprep.subr.mxu0 0.0
    %174 = vmatpush1.msra.mxu0 %v75
    %175 = vmatprep.subr.mxu0 0.0
    %176 = vmatpush1.msra.mxu0 %v76
    %177 = vmatprep.subr.mxu0 0.0
    %178 = vmatpush1.msra.mxu0 %v77
    %179 = vmatprep.subr.mxu0 0.0
    %180 = vmatpush1.msra.mxu0 %v78
    %181 = vmatprep.subr.mxu0 0.0
    %182 = vmatpush1.msra.mxu0 %v79
    %183 = vmatprep.subr.mxu0 0.0
    %184 = vmatpush1.msra.mxu0 %v80
    %185 = vmatprep.subr.mxu0 0.0
    %186 = vmatpush1.msra.mxu0 %v81
    %187 = vmatprep.subr.mxu0 0.0
    %188 = vmatpush1.msra.mxu0 %v82
    %189 = vmatprep.subr.mxu0 0.0
    %190 = vmatpush1.msra.mxu0 %v83
    %191 = vmatprep.subr.mxu0 0.0
    %192 = vmatpush1.msra.mxu0 %v84
    %193 = vmatprep.subr.mxu0 0.0
    %194 = vmatpush1.msra.mxu0 %v85
    %195 = vmatprep.subr.mxu0 0.0
    %196 = vmatpush1.msra.mxu0 %v86
    %197 = vmatprep.subr.mxu0 0.0
    %198 = vmatpush1.msra.mxu0 %v87
    %199 = vmatprep.subr.mxu0 0.0
    %200 = vmatpush1.msra.mxu0 %v88
    %201 = vmatprep.subr.mxu0 0.0
    %202 = vmatpush1.msra.mxu0 %v89
    %203 = vmatprep.subr.mxu0 0.0
    %204 = vmatpush1.msra.mxu0 %v90
    %205 = vmatprep.subr.mxu0 0.0
    %206 = vmatpush1.msra.mxu0 %v91
    %207 = vmatprep.subr.mxu0 0.0
    %208 = vmatpush1.msra.mxu0 %v92
    %209 = vmatprep.subr.mxu0 0.0
    %210 = vmatpush1.msra.mxu0 %v93
    %211 = vmatprep.subr.mxu0 0.0
    %212 = vmatpush1.msra.mxu0 %v94
    %213 = vmatprep.subr.mxu0 0.0
    %214 = vmatpush1.msra.mxu0 %v95
    %215 = vmatprep.subr.mxu0 0.0
    %216 = vmatpush1.msra.mxu0 %v96
    %217 = vmatprep.subr.mxu0 0.0
    %218 = vmatpush1.msra.mxu0 %v97
    %219 = vmatprep.mubr.f32.mxu0 %v19
    %220 = vmatmul.mubr.f32.gmra.mrb[0].mxu0 %v18
    %v221 = vpop.f32.mrb[0].mxu0
    %v222 = vadd.f32 0.0, %v221
    %v223 = vpop.f32.mrb[0].mxu0
    %224 = vmatprep.mubr.f32.mxu0 %v22
    %225 = vmatmul.mubr.f32.gmra.mrb[0].mxu0 %v21
    %v226 = vpop.f32.mrb[0].mxu0
    %v227 = vadd.f32 0.0, %v226
    %v228 = vpop.f32.mrb[0].mxu0
    %229 = vmatprep.mubr.f32.mxu0 %v25
    %230 = vmatmul.mubr.f32.gmra.mrb[0].mxu0 %v24
    %v231 = vpop.f32.mrb[0].mxu0
    %v232 = vadd.f32 0.0, %v231
    %v233 = vpop.f32.mrb[0].mxu0
    %234 = vmatprep.mubr.f32.mxu0 %v28
    %235 = vmatmul.mubr.f32.gmra.mrb[0].mxu0 %v27
    %v236 = vpop.f32.mrb[0].mxu0
    %v237 = vadd.f32 0.0, %v236
    %v238 = vpop.f32.mrb[0].mxu0
    %239 = vmatprep.mubr.f32.mxu0 %v31
    %240 = vmatmul.mubr.f32.gmra.mrb[0].mxu0 %v30
    %v241 = vpop.f32.mrb[0].mxu0
    %v242 = vadd.f32 0.0, %v241
    %v243 = vpop.f32.mrb[0].mxu0
    %244 = vmatprep.mubr.f32.mxu0 %v34
    %245 = vmatmul.mubr.f32.gmra.mrb[0].mxu0 %v33
    %v246 = vpop.f32.mrb[0].mxu0
    %v247 = vadd.f32 0.0, %v246
    %v248 = vpop.f32.mrb[0].mxu0
    %249 = vmatprep.mubr.f32.mxu0 %v37
    %250 = vmatmul.mubr.f32.gmra.mrb[0].mxu0 %v36
    %v251 = vpop.f32.mrb[0].mxu0
    %v252 = vadd.f32 0.0, %v251
    %v253 = vpop.f32.mrb[0].mxu0
    %254 = vmatprep.mubr.f32.mxu0 %v40
    %255 = vmatmul.mubr.f32.gmra.mrb[0].mxu0 %v39
    %v256 = vpop.f32.mrb[0].mxu0
    %v257 = vadd.f32 0.0, %v256
    %v258 = vpop.f32.mrb[0].mxu0
    %259 = vmatprep.mubr.f32.mxu0 %v43
    %260 = vmatmul.mubr.f32.gmra.mrb[0].mxu0 %v42
    %v261 = vpop.f32.mrb[0].mxu0
    %v262 = vadd.f32 0.0, %v261
    %v263 = vpop.f32.mrb[0].mxu0
    %264 = vmatprep.mubr.f32.mxu0 %v46
    %265 = vmatmul.mubr.f32.gmra.mrb[0].mxu0 %v45
    %v266 = vpop.f32.mrb[0].mxu0
    %v267 = vadd.f32 0.0, %v266
    %v268 = vpop.f32.mrb[0].mxu0
    %269 = vmatprep.mubr.f32.mxu0 %v49
    %270 = vmatmul.mubr.f32.gmra.mrb[0].mxu0 %v48
    %v271 = vpop.f32.mrb[0].mxu0
    %v272 = vadd.f32 0.0, %v271
    %v273 = vpop.f32.mrb[0].mxu0
    %274 = vmatprep.mubr.f32.mxu0 %v52
    %275 = vmatmul.mubr.f32.gmra.mrb[0].mxu0 %v51
    %v276 = vpop.f32.mrb[0].mxu0
    %v277 = vadd.f32 0.0, %v276
    %v278 = vpop.f32.mrb[0].mxu0
    %279 = vmatprep.mubr.f32.mxu0 %v55
    %280 = vmatmul.mubr.f32.gmra.mrb[0].mxu0 %v54
    %v281 = vpop.f32.mrb[0].mxu0
    %v282 = vadd.f32 0.0, %v281
    %v283 = vpop.f32.mrb[0].mxu0
    %284 = vmatprep.mubr.f32.mxu0 %v58
    %285 = vmatmul.mubr.f32.gmra.mrb[0].mxu0 %v57
    %v286 = vpop.f32.mrb[0].mxu0
    %v287 = vadd.f32 0.0, %v286
    %v288 = vpop.f32.mrb[0].mxu0
    %289 = vmatprep.mubr.f32.mxu0 %v61
    %290 = vmatmul.mubr.f32.gmra.mrb[0].mxu0 %v60
    %v291 = vpop.f32.mrb[0].mxu0
    %v292 = vadd.f32 0.0, %v291
    %v293 = vpop.f32.mrb[0].mxu0
    %294 = vmatprep.mubr.f32.mxu0 %v64
    %295 = vmatmul.mubr.f32.gmra.mrb[0].mxu0 %v63
    %v296 = vpop.f32.mrb[0].mxu0
    %v297 = vadd.f32 0.0, %v296
    %v298 = vpop.f32.mrb[0].mxu0
    %299 = vdwg.mxu0
    %300 = vmatprep.subr.mxu0 0.0
    %301 = vmatpush1.msra.mxu0 %v98
    %302 = vmatprep.subr.mxu0 0.0
    %303 = vmatpush1.msra.mxu0 %v99
    %304 = vmatprep.subr.mxu0 0.0
    %305 = vmatpush1.msra.mxu0 %v100
    %306 = vmatprep.subr.mxu0 0.0
    %307 = vmatpush1.msra.mxu0 %v101
    %308 = vmatprep.subr.mxu0 0.0
    %309 = vmatpush1.msra.mxu0 %v102
    %310 = vmatprep.subr.mxu0 0.0
    %311 = vmatpush1.msra.mxu0 %v103
    %312 = vmatprep.subr.mxu0 0.0
    %313 = vmatpush1.msra.mxu0 %v104
    %314 = vmatprep.subr.mxu0 0.0
    %315 = vmatpush1.msra.mxu0 %v105
    %316 = vmatprep.subr.mxu0 0.0
    %317 = vmatpush1.msra.mxu0 0.0
    %318 = vmatprep.subr.mxu0 0.0
    %319 = vmatpush1.msra.mxu0 0.0
    %320 = vmatprep.subr.mxu0 0.0
    %321 = vmatpush1.msra.mxu0 0.0
    %322 = vmatprep.subr.mxu0 0.0
    %323 = vmatpush1.msra.mxu0 0.0
    %324 = vmatprep.subr.mxu0 0.0
    %325 = vmatpush1.msra.mxu0 0.0
    %326 = vmatprep.subr.mxu0 0.0
    %327 = vmatpush1.msra.mxu0 0.0
    %328 = vmatprep.subr.mxu0 0.0
    %329 = vmatpush1.msra.mxu0 0.0
    %330 = vmatprep.subr.mxu0 0.0
    %331 = vmatpush1.msra.mxu0 0.0
    %332 = vmatprep.subr.mxu0 0.0
    %333 = vmatpush1.msra.mxu0 0.0
    %334 = vmatprep.subr.mxu0 0.0
    %335 = vmatpush1.msra.mxu0 0.0
    %336 = vmatprep.subr.mxu0 0.0
    %337 = vmatpush1.msra.mxu0 0.0
    %338 = vmatprep.subr.mxu0 0.0
    %339 = vmatpush1.msra.mxu0 0.0
    %340 = vmatprep.subr.mxu0 0.0
    %341 = vmatpush1.msra.mxu0 0.0
    %342 = vmatprep.subr.mxu0 0.0
    %343 = vmatpush1.msra.mxu0 0.0
    %344 = vmatprep.subr.mxu0 0.0
    %345 = vmatpush1.msra.mxu0 0.0
    %346 = vmatprep.subr.mxu0 0.0
    %347 = vmatpush1.msra.mxu0 0.0
    %348 = vmatprep.subr.mxu0 0.0
    %349 = vmatpush1.msra.mxu0 0.0
    %350 = vmatprep.subr.mxu0 0.0
    %351 = vmatpush1.msra.mxu0 0.0
    %352 = vmatprep.subr.mxu0 0.0
    %353 = vmatpush1.msra.mxu0 0.0
    %354 = vmatprep.subr.mxu0 0.0
    %355 = vmatpush1.msra.mxu0 0.0
    %356 = vmatprep.subr.mxu0 0.0
    %357 = vmatpush1.msra.mxu0 0.0
    %358 = vmatprep.subr.mxu0 0.0
    %359 = vmatpush1.msra.mxu0 0.0
    %360 = vmatprep.subr.mxu0 0.0
    %361 = vmatpush1.msra.mxu0 0.0
    %362 = vmatprep.subr.mxu0 0.0
    %363 = vmatpush1.msra.mxu0 0.0
    %364 = vmatprep.mubr.f32.mxu0 0.0
    %365 = vmatmul.mubr.f32.gmra.mrb[0].mxu0 %v108
    %v366 = vpop.f32.mrb[0].mxu0
    %v367 = vadd.f32 %v222, %v366
    %v368 = vpop.f32.mrb[0].mxu0
    %369 = vmatprep.mubr.f32.mxu0 0.0
    %370 = vmatmul.mubr.f32.gmra.mrb[0].mxu0 %v111
    %v371 = vpop.f32.mrb[0].mxu0
    %v372 = vadd.f32 %v227, %v371
    %v373 = vpop.f32.mrb[0].mxu0
    %374 = vmatprep.mubr.f32.mxu0 0.0
    %375 = vmatmul.mubr.f32.gmra.mrb[0].mxu0 %v114
    %v376 = vpop.f32.mrb[0].mxu0
    %v377 = vadd.f32 %v232, %v376
    %v378 = vpop.f32.mrb[0].mxu0
    %379 = vmatprep.mubr.f32.mxu0 0.0
    %380 = vmatmul.mubr.f32.gmra.mrb[0].mxu0 %v117
    %v381 = vpop.f32.mrb[0].mxu0
    %v382 = vadd.f32 %v237, %v381
    %v383 = vpop.f32.mrb[0].mxu0
    %384 = vmatprep.mubr.f32.mxu0 0.0
    %385 = vmatmul.mubr.f32.gmra.mrb[0].mxu0 %v120
    %v386 = vpop.f32.mrb[0].mxu0
    %v387 = vadd.f32 %v242, %v386
    %v388 = vpop.f32.mrb[0].mxu0
    %389 = vmatprep.mubr.f32.mxu0 0.0
    %390 = vmatmul.mubr.f32.gmra.mrb[0].mxu0 %v123
    %v391 = vpop.f32.mrb[0].mxu0
    %v392 = vadd.f32 %v247, %v391
    %v393 = vpop.f32.mrb[0].mxu0
    %394 = vmatprep.mubr.f32.mxu0 0.0
    %395 = vmatmul.mubr.f32.gmra.mrb[0].mxu0 %v126
    %v396 = vpop.f32.mrb[0].mxu0
    %v397 = vadd.f32 %v252, %v396
    %v398 = vpop.f32.mrb[0].mxu0
    %399 = vmatprep.mubr.f32.mxu0 0.0
    %400 = vmatmul.mubr.f32.gmra.mrb[0].mxu0 %v129
    %v401 = vpop.f32.mrb[0].mxu0
    %v402 = vadd.f32 %v257, %v401
    %v403 = vpop.f32.mrb[0].mxu0
    %404 = vmatprep.mubr.f32.mxu0 0.0
    %405 = vmatmul.mubr.f32.gmra.mrb[0].mxu0 %v132
    %v406 = vpop.f32.mrb[0].mxu0
    %v407 = vadd.f32 %v262, %v406
    %v408 = vpop.f32.mrb[0].mxu0
    %409 = vmatprep.mubr.f32.mxu0 0.0
    %410 = vmatmul.mubr.f32.gmra.mrb[0].mxu0 %v135
    %v411 = vpop.f32.mrb[0].mxu0
    %v412 = vadd.f32 %v267, %v411
    %v413 = vpop.f32.mrb[0].mxu0
    %414 = vmatprep.mubr.f32.mxu0 0.0
    %415 = vmatmul.mubr.f32.gmra.mrb[0].mxu0 %v138
    %v416 = vpop.f32.mrb[0].mxu0
    %v417 = vadd.f32 %v272, %v416
    %v418 = vpop.f32.mrb[0].mxu0
    %419 = vmatprep.mubr.f32.mxu0 0.0
    %420 = vmatmul.mubr.f32.gmra.mrb[0].mxu0 %v141
    %v421 = vpop.f32.mrb[0].mxu0
    %v422 = vadd.f32 %v277, %v421
    %v423 = vpop.f32.mrb[0].mxu0
    %424 = vmatprep.mubr.f32.mxu0 0.0
    %425 = vmatmul.mubr.f32.gmra.mrb[0].mxu0 %v144
    %v426 = vpop.f32.mrb[0].mxu0
    %v427 = vadd.f32 %v282, %v426
    %v428 = vpop.f32.mrb[0].mxu0
    %429 = vmatprep.mubr.f32.mxu0 0.0
    %430 = vmatmul.mubr.f32.gmra.mrb[0].mxu0 %v147
    %v431 = vpop.f32.mrb[0].mxu0
    %v432 = vadd.f32 %v287, %v431
    %v433 = vpop.f32.mrb[0].mxu0
    %434 = vmatprep.mubr.f32.mxu0 0.0
    %435 = vmatmul.mubr.f32.gmra.mrb[0].mxu0 %v150
    %v436 = vpop.f32.mrb[0].mxu0
    %v437 = vadd.f32 %v292, %v436
    %v438 = vpop.f32.mrb[0].mxu0
    %439 = vmatprep.mubr.f32.mxu0 0.0
    %440 = vmatmul.mubr.f32.gmra.mrb[0].mxu0 %v153
    %v441 = vpop.f32.mrb[0].mxu0
    %v442 = vadd.f32 %v297, %v441
    %v443 = vpop.f32.mrb[0].mxu0
    %444 = vdwg.mxu0
    %v445 = vld [vmem:[%s3] sm:$0x1]
    %v446 = vld [vmem:[%s2] sm:$0xff]
    %v447 = vld [vmem:[%s2 + $0x8] sm:$0xff]
    %v448 = vld [vmem:[%s2 + $0x10] sm:$0xff]
    %v449 = vld [vmem:[%s2 + $0x18] sm:$0xff]
    %vm450 = vcmask 261120
    %v452 = vsel %vm450, %v367, 0
    %v455 = vsel %vm450, %v372, 0
    %v458 = vsel %vm450, %v377, 0
    %v461 = vsel %vm450, %v382, 0
    %v464 = vsel %vm450, %v387, 0
    %v467 = vsel %vm450, %v392, 0
    %v470 = vsel %vm450, %v397, 0
    %v473 = vsel %vm450, %v402, 0
    %v476 = vsel %vm450, %v407, 0
    %v479 = vsel %vm450, %v412, 0
    %v482 = vsel %vm450, %v417, 0
    %v485 = vsel %vm450, %v422, 0
    %v488 = vsel %vm450, %v427, 0
    %v491 = vsel %vm450, %v432, 0
    %v494 = vsel %vm450, %v437, 0
    %v497 = vsel %vm450, %v442, 0
    %499 = vmatprep.subr.mxu0 0.0
    %500 = vmatpush1.msra.mxu0 %v446
    %501 = vmatprep.subr.mxu0 0.0
    %502 = vmatpush1.msra.mxu0 %v447
    %503 = vmatprep.subr.mxu0 0.0
    %504 = vmatpush1.msra.mxu0 %v448
    %505 = vmatprep.subr.mxu0 0.0
    %506 = vmatpush1.msra.mxu0 %v449
    %507 = vmatprep.subr.mxu0 0.0
    %508 = vmatpush1.msra.mxu0 0.0
    %509 = vmatprep.subr.mxu0 0.0
    %510 = vmatpush1.msra.mxu0 0.0
    %511 = vmatprep.subr.mxu0 0.0
    %512 = vmatpush1.msra.mxu0 0.0
    %513 = vmatprep.subr.mxu0 0.0
    %514 = vmatpush1.msra.mxu0 0.0
    %515 = vmatprep.subr.mxu0 0.0
    %516 = vmatpush1.msra.mxu0 0.0
    %517 = vmatprep.subr.mxu0 0.0
    %518 = vmatpush1.msra.mxu0 0.0
    %519 = vmatprep.subr.mxu0 0.0
    %520 = vmatpush1.msra.mxu0 0.0
    %521 = vmatprep.subr.mxu0 0.0
    %522 = vmatpush1.msra.mxu0 0.0
    %523 = vmatprep.subr.mxu0 0.0
    %524 = vmatpush1.msra.mxu0 0.0
    %525 = vmatprep.subr.mxu0 0.0
    %526 = vmatpush1.msra.mxu0 0.0
    %527 = vmatprep.subr.mxu0 0.0
    %528 = vmatpush1.msra.mxu0 0.0
    %529 = vmatprep.subr.mxu0 0.0
    %530 = vmatpush1.msra.mxu0 0.0
    %531 = vmatprep.subr.mxu0 0.0
    %532 = vmatpush1.msra.mxu0 0.0
    %533 = vmatprep.subr.mxu0 0.0
    %534 = vmatpush1.msra.mxu0 0.0
    %535 = vmatprep.subr.mxu0 0.0
    %536 = vmatpush1.msra.mxu0 0.0
    %537 = vmatprep.subr.mxu0 0.0
    %538 = vmatpush1.msra.mxu0 0.0
    %539 = vmatprep.subr.mxu0 0.0
    %540 = vmatpush1.msra.mxu0 0.0
    %541 = vmatprep.subr.mxu0 0.0
    %542 = vmatpush1.msra.mxu0 0.0
    %543 = vmatprep.subr.mxu0 0.0
    %544 = vmatpush1.msra.mxu0 0.0
    %545 = vmatprep.subr.mxu0 0.0
    %546 = vmatpush1.msra.mxu0 0.0
    %547 = vmatprep.subr.mxu0 0.0
    %548 = vmatpush1.msra.mxu0 0.0
    %549 = vmatprep.subr.mxu0 0.0
    %550 = vmatpush1.msra.mxu0 0.0
    %551 = vmatprep.subr.mxu0 0.0
    %552 = vmatpush1.msra.mxu0 0.0
    %553 = vmatprep.subr.mxu0 0.0
    %554 = vmatpush1.msra.mxu0 0.0
    %555 = vmatprep.subr.mxu0 0.0
    %556 = vmatpush1.msra.mxu0 0.0
    %557 = vmatprep.subr.mxu0 0.0
    %558 = vmatpush1.msra.mxu0 0.0
    %559 = vmatprep.subr.mxu0 0.0
    %560 = vmatpush1.msra.mxu0 0.0
    %561 = vmatprep.subr.mxu0 0.0
    %562 = vmatpush1.msra.mxu0 0.0
    %563 = vmatprep.mubr.f32.mxu0 0.0
    %564 = vmatmul.mubr.f32.gmra.mrb[0].mxu0 %v452
    %v565 = vpop.f32.mrb[0].mxu0
    %v566 = vadd.f32 0.0, %v565
    %v567 = vpop.f32.mrb[0].mxu0
    %568 = vmatprep.mubr.f32.mxu0 0.0
    %569 = vmatmul.mubr.f32.gmra.mrb[0].mxu0 %v455
    %v570 = vpop.f32.mrb[0].mxu0
    %v571 = vadd.f32 0.0, %v570
    %v572 = vpop.f32.mrb[0].mxu0
    %573 = vmatprep.mubr.f32.mxu0 0.0
    %574 = vmatmul.mubr.f32.gmra.mrb[0].mxu0 %v458
    %v575 = vpop.f32.mrb[0].mxu0
    %v576 = vadd.f32 0.0, %v575
    %v577 = vpop.f32.mrb[0].mxu0
    %578 = vmatprep.mubr.f32.mxu0 0.0
    %579 = vmatmul.mubr.f32.gmra.mrb[0].mxu0 %v461
    %v580 = vpop.f32.mrb[0].mxu0
    %v581 = vadd.f32 0.0, %v580
    %v582 = vpop.f32.mrb[0].mxu0
    %583 = vmatprep.mubr.f32.mxu0 0.0
    %584 = vmatmul.mubr.f32.gmra.mrb[0].mxu0 %v464
    %v585 = vpop.f32.mrb[0].mxu0
    %v586 = vadd.f32 0.0, %v585
    %v587 = vpop.f32.mrb[0].mxu0
    %588 = vmatprep.mubr.f32.mxu0 0.0
    %589 = vmatmul.mubr.f32.gmra.mrb[0].mxu0 %v467
    %v590 = vpop.f32.mrb[0].mxu0
    %v591 = vadd.f32 0.0, %v590
    %v592 = vpop.f32.mrb[0].mxu0
    %593 = vmatprep.mubr.f32.mxu0 0.0
    %594 = vmatmul.mubr.f32.gmra.mrb[0].mxu0 %v470
    %v595 = vpop.f32.mrb[0].mxu0
    %v596 = vadd.f32 0.0, %v595
    %v597 = vpop.f32.mrb[0].mxu0
    %598 = vmatprep.mubr.f32.mxu0 0.0
    %599 = vmatmul.mubr.f32.gmra.mrb[0].mxu0 %v473
    %v600 = vpop.f32.mrb[0].mxu0
    %v601 = vadd.f32 0.0, %v600
    %v602 = vpop.f32.mrb[0].mxu0
    %603 = vmatprep.mubr.f32.mxu0 0.0
    %604 = vmatmul.mubr.f32.gmra.mrb[0].mxu0 %v476
    %v605 = vpop.f32.mrb[0].mxu0
    %v606 = vadd.f32 0.0, %v605
    %v607 = vpop.f32.mrb[0].mxu0
    %608 = vmatprep.mubr.f32.mxu0 0.0
    %609 = vmatmul.mubr.f32.gmra.mrb[0].mxu0 %v479
    %v610 = vpop.f32.mrb[0].mxu0
    %v611 = vadd.f32 0.0, %v610
    %v612 = vpop.f32.mrb[0].mxu0
    %613 = vmatprep.mubr.f32.mxu0 0.0
    %614 = vmatmul.mubr.f32.gmra.mrb[0].mxu0 %v482
    %v615 = vpop.f32.mrb[0].mxu0
    %v616 = vadd.f32 0.0, %v615
    %v617 = vpop.f32.mrb[0].mxu0
    %618 = vmatprep.mubr.f32.mxu0 0.0
    %619 = vmatmul.mubr.f32.gmra.mrb[0].mxu0 %v485
    %v620 = vpop.f32.mrb[0].mxu0
    %v621 = vadd.f32 0.0, %v620
    %v622 = vpop.f32.mrb[0].mxu0
    %623 = vmatprep.mubr.f32.mxu0 0.0
    %624 = vmatmul.mubr.f32.gmra.mrb[0].mxu0 %v488
    %v625 = vpop.f32.mrb[0].mxu0
    %v626 = vadd.f32 0.0, %v625
    %v627 = vpop.f32.mrb[0].mxu0
    %628 = vmatprep.mubr.f32.mxu0 0.0
    %629 = vmatmul.mubr.f32.gmra.mrb[0].mxu0 %v491
    %v630 = vpop.f32.mrb[0].mxu0
    %v631 = vadd.f32 0.0, %v630
    %v632 = vpop.f32.mrb[0].mxu0
    %633 = vmatprep.mubr.f32.mxu0 0.0
    %634 = vmatmul.mubr.f32.gmra.mrb[0].mxu0 %v494
    %v635 = vpop.f32.mrb[0].mxu0
    %v636 = vadd.f32 0.0, %v635
    %v637 = vpop.f32.mrb[0].mxu0
    %638 = vmatprep.mubr.f32.mxu0 0.0
    %639 = vmatmul.mubr.f32.gmra.mrb[0].mxu0 %v497
    %v640 = vpop.f32.mrb[0].mxu0
    %v641 = vadd.f32 0.0, %v640
    %v642 = vpop.f32.mrb[0].mxu0
    %643 = vdwg.mxu0
    %v645 = vlaneseq
    %v646 = vshrl.u32 %v645, 7
    %v647 = vsub.s32 0, %v646
    %v648 = vrot.slane %v445, %v647
    %v650 = vadd.f32 %v648, %v566
    %v651 = vadd.f32 %v648, %v571
    %v652 = vadd.f32 %v648, %v576
    %v653 = vadd.f32 %v648, %v581
    %v654 = vadd.f32 %v648, %v586
    %v655 = vadd.f32 %v648, %v591
    %v656 = vadd.f32 %v648, %v596
    %v657 = vadd.f32 %v648, %v601
    %v658 = vadd.f32 %v648, %v606
    %v659 = vadd.f32 %v648, %v611
    %v660 = vadd.f32 %v648, %v616
    %v661 = vadd.f32 %v648, %v621
    %v662 = vadd.f32 %v648, %v626
    %v663 = vadd.f32 %v648, %v631
    %v664 = vadd.f32 %v648, %v636
    %v665 = vadd.f32 %v648, %v641
    %v666 = vlaneseq
    %v667 = vand.u32 %v666, 127
    %vm668 = vcmask 130048
    %v669 = vsel %vm668, %v650, inf
    %670 = vmin.xlane.f32.xlu0 %v669
    %v671 = vpop.xlane.xlu0 %670
    %v672 = vsel %vm668, %v651, inf
    %673 = vmin.xlane.f32.xlu0 %v672
    %v674 = vpop.xlane.xlu0 %673
    %v675 = vsel %vm668, %v652, inf
    %676 = vmin.xlane.f32.xlu0 %v675
    %v677 = vpop.xlane.xlu0 %676
    %v678 = vsel %vm668, %v653, inf
    %679 = vmin.xlane.f32.xlu0 %v678
    %v680 = vpop.xlane.xlu0 %679
    %v681 = vsel %vm668, %v654, inf
    %682 = vmin.xlane.f32.xlu0 %v681
    %v683 = vpop.xlane.xlu0 %682
    %v684 = vsel %vm668, %v655, inf
    %685 = vmin.xlane.f32.xlu0 %v684
    %v686 = vpop.xlane.xlu0 %685
    %v687 = vsel %vm668, %v656, inf
    %688 = vmin.xlane.f32.xlu0 %v687
    %v689 = vpop.xlane.xlu0 %688
    %v690 = vsel %vm668, %v657, inf
    %691 = vmin.xlane.f32.xlu0 %v690
    %v692 = vpop.xlane.xlu0 %691
    %v693 = vsel %vm668, %v658, inf
    %694 = vmin.xlane.f32.xlu0 %v693
    %v695 = vpop.xlane.xlu0 %694
    %v696 = vsel %vm668, %v659, inf
    %697 = vmin.xlane.f32.xlu0 %v696
    %v698 = vpop.xlane.xlu0 %697
    %v699 = vsel %vm668, %v660, inf
    %700 = vmin.xlane.f32.xlu0 %v699
    %v701 = vpop.xlane.xlu0 %700
    %v702 = vsel %vm668, %v661, inf
    %703 = vmin.xlane.f32.xlu0 %v702
    %v704 = vpop.xlane.xlu0 %703
    %v705 = vsel %vm668, %v662, inf
    %706 = vmin.xlane.f32.xlu0 %v705
    %v707 = vpop.xlane.xlu0 %706
    %v708 = vsel %vm668, %v663, inf
    %709 = vmin.xlane.f32.xlu0 %v708
    %v710 = vpop.xlane.xlu0 %709
    %v711 = vsel %vm668, %v664, inf
    %712 = vmin.xlane.f32.xlu0 %v711
    %v713 = vpop.xlane.xlu0 %712
    %v714 = vsel %vm668, %v665, inf
    %715 = vmin.xlane.f32.xlu0 %v714
    %v716 = vpop.xlane.xlu0 %715
    %vm717 = vcmp.le.f32.partialorder %v650, %v671
    %vm718 = vcmp.le.f32.partialorder %v651, %v674
    %vm719 = vcmp.le.f32.partialorder %v652, %v677
    %vm720 = vcmp.le.f32.partialorder %v653, %v680
    %vm721 = vcmp.le.f32.partialorder %v654, %v683
    %vm722 = vcmp.le.f32.partialorder %v655, %v686
    %vm723 = vcmp.le.f32.partialorder %v656, %v689
    %vm724 = vcmp.le.f32.partialorder %v657, %v692
    %vm725 = vcmp.le.f32.partialorder %v658, %v695
    %vm726 = vcmp.le.f32.partialorder %v659, %v698
    %vm727 = vcmp.le.f32.partialorder %v660, %v701
    %vm728 = vcmp.le.f32.partialorder %v661, %v704
    %vm729 = vcmp.le.f32.partialorder %v662, %v707
    %vm730 = vcmp.le.f32.partialorder %v663, %v710
    %vm731 = vcmp.le.f32.partialorder %v664, %v713
    %vm732 = vcmp.le.f32.partialorder %v665, %v716
    %v733 = vsel %vm717, %v667, 16
    %v734 = vsel %vm718, %v667, 16
    %v735 = vsel %vm719, %v667, 16
    %v736 = vsel %vm720, %v667, 16
    %v737 = vsel %vm721, %v667, 16
    %v738 = vsel %vm722, %v667, 16
    %v739 = vsel %vm723, %v667, 16
    %v740 = vsel %vm724, %v667, 16
    %v741 = vsel %vm725, %v667, 16
    %v742 = vsel %vm726, %v667, 16
    %v743 = vsel %vm727, %v667, 16
    %v744 = vsel %vm728, %v667, 16
    %v745 = vsel %vm729, %v667, 16
    %v746 = vsel %vm730, %v667, 16
    %v747 = vsel %vm731, %v667, 16
    %v748 = vsel %vm732, %v667, 16
    %v749 = vsel %vm668, %v733, 2147483647
    %v750 = vand.u32 %v749, 65535
    %v751 = vshra.s32 %v749, 16
    %v752 = vcvt.s32.f32 %v750
    %v753 = vcvt.s32.f32 %v751
    %754 = vmin.xlane.f32.xlu0 %v753
    %v755 = vpop.xlane.xlu0 %754
    %vm756 = vcmp.eq.f32.partialorder %v753, %v755
    %v757 = vsel %vm756, %v752, inf
    %758 = vmin.xlane.f32.xlu0 %v757
    %v759 = vpop.xlane.xlu0 %758
    %v760 = vcvt.f32.s32 %v759
    %v761 = vcvt.f32.s32 %v755
    %v762 = vshll.u32 %v761, 16
    %v763 = vadd.s32 %v762, %v760
    %v764 = vsel %vm668, %v734, 2147483647
    %v765 = vand.u32 %v764, 65535
    %v766 = vshra.s32 %v764, 16
    %v767 = vcvt.s32.f32 %v765
    %v768 = vcvt.s32.f32 %v766
    %769 = vmin.xlane.f32.xlu0 %v768
    %v770 = vpop.xlane.xlu0 %769
    %vm771 = vcmp.eq.f32.partialorder %v768, %v770
    %v772 = vsel %vm771, %v767, inf
    %773 = vmin.xlane.f32.xlu0 %v772
    %v774 = vpop.xlane.xlu0 %773
    %v775 = vcvt.f32.s32 %v774
    %v776 = vcvt.f32.s32 %v770
    %v777 = vshll.u32 %v776, 16
    %v778 = vadd.s32 %v777, %v775
    %v779 = vsel %vm668, %v735, 2147483647
    %v780 = vand.u32 %v779, 65535
    %v781 = vshra.s32 %v779, 16
    %v782 = vcvt.s32.f32 %v780
    %v783 = vcvt.s32.f32 %v781
    %784 = vmin.xlane.f32.xlu0 %v783
    %v785 = vpop.xlane.xlu0 %784
    %vm786 = vcmp.eq.f32.partialorder %v783, %v785
    %v787 = vsel %vm786, %v782, inf
    %788 = vmin.xlane.f32.xlu0 %v787
    %v789 = vpop.xlane.xlu0 %788
    %v790 = vcvt.f32.s32 %v789
    %v791 = vcvt.f32.s32 %v785
    %v792 = vshll.u32 %v791, 16
    %v793 = vadd.s32 %v792, %v790
    %v794 = vsel %vm668, %v736, 2147483647
    %v795 = vand.u32 %v794, 65535
    %v796 = vshra.s32 %v794, 16
    %v797 = vcvt.s32.f32 %v795
    %v798 = vcvt.s32.f32 %v796
    %799 = vmin.xlane.f32.xlu0 %v798
    %v800 = vpop.xlane.xlu0 %799
    %vm801 = vcmp.eq.f32.partialorder %v798, %v800
    %v802 = vsel %vm801, %v797, inf
    %803 = vmin.xlane.f32.xlu0 %v802
    %v804 = vpop.xlane.xlu0 %803
    %v805 = vcvt.f32.s32 %v804
    %v806 = vcvt.f32.s32 %v800
    %v807 = vshll.u32 %v806, 16
    %v808 = vadd.s32 %v807, %v805
    %v809 = vsel %vm668, %v737, 2147483647
    %v810 = vand.u32 %v809, 65535
    %v811 = vshra.s32 %v809, 16
    %v812 = vcvt.s32.f32 %v810
    %v813 = vcvt.s32.f32 %v811
    %814 = vmin.xlane.f32.xlu0 %v813
    %v815 = vpop.xlane.xlu0 %814
    %vm816 = vcmp.eq.f32.partialorder %v813, %v815
    %v817 = vsel %vm816, %v812, inf
    %818 = vmin.xlane.f32.xlu0 %v817
    %v819 = vpop.xlane.xlu0 %818
    %v820 = vcvt.f32.s32 %v819
    %v821 = vcvt.f32.s32 %v815
    %v822 = vshll.u32 %v821, 16
    %v823 = vadd.s32 %v822, %v820
    %v824 = vsel %vm668, %v738, 2147483647
    %v825 = vand.u32 %v824, 65535
    %v826 = vshra.s32 %v824, 16
    %v827 = vcvt.s32.f32 %v825
    %v828 = vcvt.s32.f32 %v826
    %829 = vmin.xlane.f32.xlu0 %v828
    %v830 = vpop.xlane.xlu0 %829
    %vm831 = vcmp.eq.f32.partialorder %v828, %v830
    %v832 = vsel %vm831, %v827, inf
    %833 = vmin.xlane.f32.xlu0 %v832
    %v834 = vpop.xlane.xlu0 %833
    %v835 = vcvt.f32.s32 %v834
    %v836 = vcvt.f32.s32 %v830
    %v837 = vshll.u32 %v836, 16
    %v838 = vadd.s32 %v837, %v835
    %v839 = vsel %vm668, %v739, 2147483647
    %v840 = vand.u32 %v839, 65535
    %v841 = vshra.s32 %v839, 16
    %v842 = vcvt.s32.f32 %v840
    %v843 = vcvt.s32.f32 %v841
    %844 = vmin.xlane.f32.xlu0 %v843
    %v845 = vpop.xlane.xlu0 %844
    %vm846 = vcmp.eq.f32.partialorder %v843, %v845
    %v847 = vsel %vm846, %v842, inf
    %848 = vmin.xlane.f32.xlu0 %v847
    %v849 = vpop.xlane.xlu0 %848
    %v850 = vcvt.f32.s32 %v849
    %v851 = vcvt.f32.s32 %v845
    %v852 = vshll.u32 %v851, 16
    %v853 = vadd.s32 %v852, %v850
    %v854 = vsel %vm668, %v740, 2147483647
    %v855 = vand.u32 %v854, 65535
    %v856 = vshra.s32 %v854, 16
    %v857 = vcvt.s32.f32 %v855
    %v858 = vcvt.s32.f32 %v856
    %859 = vmin.xlane.f32.xlu0 %v858
    %v860 = vpop.xlane.xlu0 %859
    %vm861 = vcmp.eq.f32.partialorder %v858, %v860
    %v862 = vsel %vm861, %v857, inf
    %863 = vmin.xlane.f32.xlu0 %v862
    %v864 = vpop.xlane.xlu0 %863
    %v865 = vcvt.f32.s32 %v864
    %v866 = vcvt.f32.s32 %v860
    %v867 = vshll.u32 %v866, 16
    %v868 = vadd.s32 %v867, %v865
    %v869 = vsel %vm668, %v741, 2147483647
    %v870 = vand.u32 %v869, 65535
    %v871 = vshra.s32 %v869, 16
    %v872 = vcvt.s32.f32 %v870
    %v873 = vcvt.s32.f32 %v871
    %874 = vmin.xlane.f32.xlu0 %v873
    %v875 = vpop.xlane.xlu0 %874
    %vm876 = vcmp.eq.f32.partialorder %v873, %v875
    %v877 = vsel %vm876, %v872, inf
    %878 = vmin.xlane.f32.xlu0 %v877
    %v879 = vpop.xlane.xlu0 %878
    %v880 = vcvt.f32.s32 %v879
    %v881 = vcvt.f32.s32 %v875
    %v882 = vshll.u32 %v881, 16
    %v883 = vadd.s32 %v882, %v880
    %v884 = vsel %vm668, %v742, 2147483647
    %v885 = vand.u32 %v884, 65535
    %v886 = vshra.s32 %v884, 16
    %v887 = vcvt.s32.f32 %v885
    %v888 = vcvt.s32.f32 %v886
    %889 = vmin.xlane.f32.xlu0 %v888
    %v890 = vpop.xlane.xlu0 %889
    %vm891 = vcmp.eq.f32.partialorder %v888, %v890
    %v892 = vsel %vm891, %v887, inf
    %893 = vmin.xlane.f32.xlu0 %v892
    %v894 = vpop.xlane.xlu0 %893
    %v895 = vcvt.f32.s32 %v894
    %v896 = vcvt.f32.s32 %v890
    %v897 = vshll.u32 %v896, 16
    %v898 = vadd.s32 %v897, %v895
    %v899 = vsel %vm668, %v743, 2147483647
    %v900 = vand.u32 %v899, 65535
    %v901 = vshra.s32 %v899, 16
    %v902 = vcvt.s32.f32 %v900
    %v903 = vcvt.s32.f32 %v901
    %904 = vmin.xlane.f32.xlu0 %v903
    %v905 = vpop.xlane.xlu0 %904
    %vm906 = vcmp.eq.f32.partialorder %v903, %v905
    %v907 = vsel %vm906, %v902, inf
    %908 = vmin.xlane.f32.xlu0 %v907
    %v909 = vpop.xlane.xlu0 %908
    %v910 = vcvt.f32.s32 %v909
    %v911 = vcvt.f32.s32 %v905
    %v912 = vshll.u32 %v911, 16
    %v913 = vadd.s32 %v912, %v910
    %v914 = vsel %vm668, %v744, 2147483647
    %v915 = vand.u32 %v914, 65535
    %v916 = vshra.s32 %v914, 16
    %v917 = vcvt.s32.f32 %v915
    %v918 = vcvt.s32.f32 %v916
    %919 = vmin.xlane.f32.xlu0 %v918
    %v920 = vpop.xlane.xlu0 %919
    %vm921 = vcmp.eq.f32.partialorder %v918, %v920
    %v922 = vsel %vm921, %v917, inf
    %923 = vmin.xlane.f32.xlu0 %v922
    %v924 = vpop.xlane.xlu0 %923
    %v925 = vcvt.f32.s32 %v924
    %v926 = vcvt.f32.s32 %v920
    %v927 = vshll.u32 %v926, 16
    %v928 = vadd.s32 %v927, %v925
    %v929 = vsel %vm668, %v745, 2147483647
    %v930 = vand.u32 %v929, 65535
    %v931 = vshra.s32 %v929, 16
    %v932 = vcvt.s32.f32 %v930
    %v933 = vcvt.s32.f32 %v931
    %934 = vmin.xlane.f32.xlu0 %v933
    %v935 = vpop.xlane.xlu0 %934
    %vm936 = vcmp.eq.f32.partialorder %v933, %v935
    %v937 = vsel %vm936, %v932, inf
    %938 = vmin.xlane.f32.xlu0 %v937
    %v939 = vpop.xlane.xlu0 %938
    %v940 = vcvt.f32.s32 %v939
    %v941 = vcvt.f32.s32 %v935
    %v942 = vshll.u32 %v941, 16
    %v943 = vadd.s32 %v942, %v940
    %v944 = vsel %vm668, %v746, 2147483647
    %v945 = vand.u32 %v944, 65535
    %v946 = vshra.s32 %v944, 16
    %v947 = vcvt.s32.f32 %v945
    %v948 = vcvt.s32.f32 %v946
    %949 = vmin.xlane.f32.xlu0 %v948
    %v950 = vpop.xlane.xlu0 %949
    %vm951 = vcmp.eq.f32.partialorder %v948, %v950
    %v952 = vsel %vm951, %v947, inf
    %953 = vmin.xlane.f32.xlu0 %v952
    %v954 = vpop.xlane.xlu0 %953
    %v955 = vcvt.f32.s32 %v954
    %v956 = vcvt.f32.s32 %v950
    %v957 = vshll.u32 %v956, 16
    %v958 = vadd.s32 %v957, %v955
    %v959 = vsel %vm668, %v747, 2147483647
    %v960 = vand.u32 %v959, 65535
    %v961 = vshra.s32 %v959, 16
    %v962 = vcvt.s32.f32 %v960
    %v963 = vcvt.s32.f32 %v961
    %964 = vmin.xlane.f32.xlu0 %v963
    %v965 = vpop.xlane.xlu0 %964
    %vm966 = vcmp.eq.f32.partialorder %v963, %v965
    %v967 = vsel %vm966, %v962, inf
    %968 = vmin.xlane.f32.xlu0 %v967
    %v969 = vpop.xlane.xlu0 %968
    %v970 = vcvt.f32.s32 %v969
    %v971 = vcvt.f32.s32 %v965
    %v972 = vshll.u32 %v971, 16
    %v973 = vadd.s32 %v972, %v970
    %v974 = vsel %vm668, %v748, 2147483647
    %v975 = vand.u32 %v974, 65535
    %v976 = vshra.s32 %v974, 16
    %v977 = vcvt.s32.f32 %v975
    %v978 = vcvt.s32.f32 %v976
    %979 = vmin.xlane.f32.xlu0 %v978
    %v980 = vpop.xlane.xlu0 %979
    %vm981 = vcmp.eq.f32.partialorder %v978, %v980
    %v982 = vsel %vm981, %v977, inf
    %983 = vmin.xlane.f32.xlu0 %v982
    %v984 = vpop.xlane.xlu0 %983
    %v985 = vcvt.f32.s32 %v984
    %v986 = vcvt.f32.s32 %v980
    %v987 = vshll.u32 %v986, 16
    %v988 = vadd.s32 %v987, %v985
    %v989 = vlaneseq
    %v990 = vshrl.u32 %v989, 7
    %v991 = vsub.s32 %v667, %v990
    %v992 = vrot.slane %v763, %v991
    %v993 = vadd.s32 %v667, 4294967288
    %v994 = vlaneseq
    %v995 = vshrl.u32 %v994, 7
    %v996 = vsub.s32 %v993, %v995
    %v997 = vrot.slane %v778, %v996
    %vm998 = vcmask 130112
    %v999 = vsel %vm998, %v997, %v992
    %v1000 = vadd.s32 %v667, 4294967280
    %v1001 = vlaneseq
    %v1002 = vshrl.u32 %v1001, 7
    %v1003 = vsub.s32 %v1000, %v1002
    %v1004 = vrot.slane %v793, %v1003
    %vm1005 = vcmask 195712
    %v1006 = vsel %vm1005, %v1004, %v999
    %v1007 = vadd.s32 %v667, 4294967272
    %v1008 = vlaneseq
    %v1009 = vshrl.u32 %v1008, 7
    %v1010 = vsub.s32 %v1007, %v1009
    %v1011 = vrot.slane %v808, %v1010
    %vm1012 = vcmask 261312
    %v1013 = vsel %vm1012, %v1011, %v1006
    %v1014 = vadd.s32 %v667, 4294967264
    %v1015 = vlaneseq
    %v1016 = vshrl.u32 %v1015, 7
    %v1017 = vsub.s32 %v1014, %v1016
    %v1018 = vrot.slane %v823, %v1017
    %vm1019 = vcmask 326912
    %v1020 = vsel %vm1019, %v1018, %v1013
    %v1021 = vadd.s32 %v667, 4294967256
    %v1022 = vlaneseq
    %v1023 = vshrl.u32 %v1022, 7
    %v1024 = vsub.s32 %v1021, %v1023
    %v1025 = vrot.slane %v838, %v1024
    %vm1026 = vcmask 392512
    %v1027 = vsel %vm1026, %v1025, %v1020
    %v1028 = vadd.s32 %v667, 4294967248
    %v1029 = vlaneseq
    %v1030 = vshrl.u32 %v1029, 7
    %v1031 = vsub.s32 %v1028, %v1030
    %v1032 = vrot.slane %v853, %v1031
    %vm1033 = vcmask 458112
    %v1034 = vsel %vm1033, %v1032, %v1027
    %v1035 = vadd.s32 %v667, 4294967240
    %v1036 = vlaneseq
    %v1037 = vshrl.u32 %v1036, 7
    %v1038 = vsub.s32 %v1035, %v1037
    %v1039 = vrot.slane %v868, %v1038
    %vm1040 = vcmask 523712
    %v1041 = vsel %vm1040, %v1039, %v1034
    %v1042 = vadd.s32 %v667, 4294967232
    %v1043 = vlaneseq
    %v1044 = vshrl.u32 %v1043, 7
    %v1045 = vsub.s32 %v1042, %v1044
    %v1046 = vrot.slane %v883, %v1045
    %vm1047 = vcmask 589312
    %v1048 = vsel %vm1047, %v1046, %v1041
    %v1049 = vadd.s32 %v667, 4294967224
    %v1050 = vlaneseq
    %v1051 = vshrl.u32 %v1050, 7
    %v1052 = vsub.s32 %v1049, %v1051
    %v1053 = vrot.slane %v898, %v1052
    %vm1054 = vcmask 654912
    %v1055 = vsel %vm1054, %v1053, %v1048
    %v1056 = vadd.s32 %v667, 4294967216
    %v1057 = vlaneseq
    %v1058 = vshrl.u32 %v1057, 7
    %v1059 = vsub.s32 %v1056, %v1058
    %v1060 = vrot.slane %v913, %v1059
    %vm1061 = vcmask 720512
    %v1062 = vsel %vm1061, %v1060, %v1055
    %v1063 = vadd.s32 %v667, 4294967208
    %v1064 = vlaneseq
    %v1065 = vshrl.u32 %v1064, 7
    %v1066 = vsub.s32 %v1063, %v1065
    %v1067 = vrot.slane %v928, %v1066
    %vm1068 = vcmask 786112
    %v1069 = vsel %vm1068, %v1067, %v1062
    %v1070 = vadd.s32 %v667, 4294967200
    %v1071 = vlaneseq
    %v1072 = vshrl.u32 %v1071, 7
    %v1073 = vsub.s32 %v1070, %v1072
    %v1074 = vrot.slane %v943, %v1073
    %vm1075 = vcmask 851712
    %v1076 = vsel %vm1075, %v1074, %v1069
    %v1077 = vadd.s32 %v667, 4294967192
    %v1078 = vlaneseq
    %v1079 = vshrl.u32 %v1078, 7
    %v1080 = vsub.s32 %v1077, %v1079
    %v1081 = vrot.slane %v958, %v1080
    %vm1082 = vcmask 917312
    %v1083 = vsel %vm1082, %v1081, %v1076
    %v1084 = vadd.s32 %v667, 4294967184
    %v1085 = vlaneseq
    %v1086 = vshrl.u32 %v1085, 7
    %v1087 = vsub.s32 %v1084, %v1086
    %v1088 = vrot.slane %v973, %v1087
    %vm1089 = vcmask 982912
    %v1090 = vsel %vm1089, %v1088, %v1083
    %v1091 = vadd.s32 %v667, 4294967176
    %v1092 = vlaneseq
    %v1093 = vshrl.u32 %v1092, 7
    %v1094 = vsub.s32 %v1091, %v1093
    %v1095 = vrot.slane %v988, %v1094
    %vm1096 = vcmask 1048512
    %v1097 = vsel %vm1096, %v1095, %v1090
    %1098 = vst [vmem:[#allocation2] sm:$0x1] %v1097
    // Predicated region
    $region18: #{tpu_custom_call.1} parent=1 // pred_check
      _
    $region19: #{tpu_custom_call.1} parent=1 // pred_check_branch
      %1100 = sbr.rel (0) target = $region21
    $region20: #{tpu_custom_call.1} parent=1 // pred_region
      %s1102 = ssub.s32 16, 16
      %1103 = vsyncadd [#allocation3], %s1102
      %s1105 = sshll.u32 [#allocation2], 4
      %s1106 = int_to_ptr.vmem [resolvable:$true] %s1105
      %1108 = dma.vmem_to_hbm [thread:$0]  %s1106, 16, %s4, [#allocation3]
    $region21: #{tpu_custom_call.1} parent=1 // pred_fallthru
      _
    // Predicated region
    $region22: #{tpu_custom_call.1} parent=1 // pred_check
      _
    $region23: #{tpu_custom_call.1} parent=1 // pred_check_branch
      %1110 = sbr.rel (0) target = $region25
    $region24: #{tpu_custom_call.1} parent=1 // pred_region
      %1111 = dma.done [#allocation3], 16
    $region25: #{tpu_custom_call.1} parent=1 // pred_fallthru
      _
    %1112 = vsyncpa [#allocation3], 1

</llo_original>
